<compile_context>
chip_gen: v5e
topology: v5e:2x2
jax: 0.10.0
libtpu: 0.0.40
codegen_flags: <defaults>
</compile_context>

<pallas_src>
import functools

import jax
import jax.numpy as jnp
from jax.experimental import pallas as pl
from jax.experimental.pallas import tpu as pltpu


def _round_up(x, m):
    return ((x + m - 1) // m) * m


# ----------------------------------------------------------------------------
# Kernels
# ----------------------------------------------------------------------------
def _trunknet_resident_kernel(y_ref, w0_ref, b0_ref, ws_ref, bs_ref, o_ref,
                              a_ref, *, n_layer, compute_dtype):
    """All weights VMEM-resident; grid = (batch tiles,)."""
    # Layer 0: bf16 inputs on the MXU, f32 accumulation, f32 bias add.
    h = jnp.dot(y_ref[...], w0_ref[...],
                preferred_element_type=jnp.float32) + b0_ref[...]
    # Hidden layers (n_layer is static -> unrolled). The post-ReLU activation
    # is staged through a bf16 VMEM scratch: half the inter-layer vld/vst bytes.
    for i in range(n_layer):
        a_ref[...] = jnp.maximum(h, 0.0).astype(compute_dtype)
        h = jnp.dot(a_ref[...], ws_ref[i],
                    preferred_element_type=jnp.float32) + bs_ref[i]
    # Final dot+bias goes straight to the output block (no extra f32 copy).
    o_ref[...] = h.astype(o_ref.dtype)


def _trunknet_stream_kernel(y_ref, w0_ref, b0_ref, wk_ref, bk_ref, o_ref,
                            h_ref, *, compute_dtype):
    """Per-layer weight streaming; grid = (batch tiles, n_layer + 1).

    The f32 activation is carried across layer steps in the VMEM scratch
    h_ref; ws/bs arrive one (1, H, H) / (1, 1, H) block per step.
    """
    k = pl.program_id(1)
    n_k = pl.num_programs(1)

    def _emit(h):
        @pl.when(k == n_k - 1)
        def _():
            o_ref[...] = h.astype(o_ref.dtype)

        @pl.when(k != n_k - 1)
        def _():
            h_ref[...] = h

    @pl.when(k == 0)
    def _():
        _emit(jnp.dot(y_ref[...], w0_ref[...],
                      preferred_element_type=jnp.float32) + b0_ref[...])

    @pl.when(k > 0)
    def _():
        a = jnp.maximum(h_ref[...], 0.0).astype(compute_dtype)
        _emit(jnp.dot(a, wk_ref[0],
                      preferred_element_type=jnp.float32) + bk_ref[0])


# ----------------------------------------------------------------------------
# Parameter preparation (hoisted out of the per-call hot path)
# ----------------------------------------------------------------------------
def prepare_trunknet_params(w0, b0, ws, bs, *, compute_dtype=jnp.bfloat16):
    """Pad to lane-aligned shapes and cast weights to the MXU dtype — once.

    w0: (y_dim, H) pre-transposed first-layer weight (torch does y @ W.T + b)
    b0: (1, H); ws: (L, H, H) pre-transposed; bs: (L, 1, H)
    """
    y_dim, hidden = w0.shape
    n_layer = ws.shape[0]
    y_pad = _round_up(y_dim, 128)
    h_pad = _round_up(hidden, 128)
    l_pad = max(n_layer, 1)  # keep valid BlockSpecs even for n_layer == 0

    w0_p = (jnp.zeros((y_pad, h_pad), compute_dtype)
            .at[:y_dim, :hidden].set(w0.astype(compute_dtype)))
    b0_p = (jnp.zeros((1, h_pad), jnp.float32)
            .at[:, :hidden].set(b0.reshape(1, hidden)))
    ws_p = (jnp.zeros((l_pad, h_pad, h_pad), compute_dtype)
            .at[:n_layer, :hidden, :hidden].set(ws.astype(compute_dtype)))
    bs_p = (jnp.zeros((l_pad, 1, h_pad), jnp.float32)
            .at[:n_layer, :, :hidden].set(bs.reshape(n_layer, 1, hidden)))

    meta = dict(y_dim=y_dim, hidden=hidden, n_layer=n_layer,
                y_pad=y_pad, h_pad=h_pad, l_pad=l_pad)
    return (w0_p, b0_p, ws_p, bs_p), meta


# ----------------------------------------------------------------------------
# Forward
# ----------------------------------------------------------------------------
def trunknet_forward(y, params, meta, *, block_m=256,
                     compute_dtype=jnp.bfloat16, stream=None):
    """TrunkNet forward. y: (B, y_dim) f32 -> (B, hidden) f32."""
    w0_p, b0_p, ws_p, bs_p = params
    batch, y_dim = y.shape
    assert y_dim == meta["y_dim"]
    hidden, n_layer = meta["hidden"], meta["n_layer"]
    y_pad, h_pad, l_pad = meta["y_pad"], meta["h_pad"], meta["l_pad"]
    wb = jnp.dtype(compute_dtype).itemsize

    # Per-TensorCore VMEM capacity (128 MiB on v5e/v6e, 64 MiB on v7x).
    try:
        vmem_cap = int(pltpu.get_tpu_info().vmem_capacity_bytes)
    except Exception:  # pragma: no cover - unknown backend
        vmem_cap = 64 * 1024 * 1024

    resident_w_bytes = ((y_pad * h_pad + l_pad * h_pad * h_pad) * wb
                        + (l_pad + 1) * h_pad * 4)
    if stream is None:
        stream = (n_layer >= 1
                  and resident_w_bytes > vmem_cap - 8 * 1024 * 1024)
    stream = bool(stream) and n_layer >= 1

    # --- batch tile -----------------------------------------------------------
    batch_rnd = _round_up(batch, 8)
    bt = min(block_m, batch_rnd)
    if stream:
        # Streaming re-reads L*H^2 weight bytes per batch tile; keep the tile
        # tall (>=512 rows) so arithmetic intensity stays above the HBM roofline.
        bt = min(max(bt, 512), batch_rnd)
    elif bt < batch_rnd < 2 * bt:
        # Split into >=2 tiles: less padding waste and both v7x TCs get work.
        bt = _round_up((batch_rnd + 1) // 2, 8)
    batch_pad = _round_up(batch, bt)
    n_bt = batch_pad // bt

    # Pre-cast activations to bf16 in the wrapper (halves the y DMA per tile).
    y_p = (jnp.zeros((batch_pad, y_pad), compute_dtype)
           .at[:batch, :y_dim].set(y.astype(compute_dtype)))

    # --- VMEM estimate & limit (generation-aware) -----------------------------
    act_tiles = (2 * bt * y_pad * wb          # y tiles (double-buffered, bf16)
                 + 2 * bt * h_pad * 4         # out tiles (double-buffered, f32)
                 + 2 * bt * h_pad * 4)        # f32 layer-output temporaries
    if not stream:
        # Conservative (covers the double-buffered fallback too).
        est_vmem = 2 * resident_w_bytes + act_tiles + bt * h_pad * wb
    else:
        est_vmem = (2 * (y_pad * h_pad * wb + h_pad * 4)        # w0 / b0
                    + 2 * (h_pad * h_pad * wb + h_pad * 4)      # streamed ws/bs
                    + act_tiles + bt * h_pad * 4)               # carried act
    vmem_limit = int(min(max(est_vmem * 1.25, 32 * 1024 * 1024),
                         vmem_cap - 4 * 1024 * 1024))

    # --- cost estimate ---------------------------------------------------------
    flops = 2 * batch_pad * (y_pad * h_pad + n_layer * h_pad * h_pad)
    weight_reads = 1 if not stream else n_bt
    bytes_accessed = (batch_pad * y_pad * wb                       # y in
                      + batch_pad * h_pad * 4                      # out
                      + weight_reads * (y_pad * h_pad * wb
                                        + l_pad * h_pad * h_pad * wb
                                        + (l_pad + 1) * h_pad * 4))
    cost = pl.CostEstimate(flops=int(flops), transcendentals=0,
                           bytes_accessed=int(bytes_accessed))

    # --- grid / specs / kernel -------------------------------------------------
    if not stream:
        grid = (n_bt,)
        dims = ("parallel",)
        out_spec = pl.BlockSpec((bt, h_pad), lambda i: (i, 0))
        scratch = [pltpu.VMEM((bt, h_pad), compute_dtype)]
        kernel = functools.partial(_trunknet_resident_kernel,
                                   n_layer=n_layer, compute_dtype=compute_dtype)

        def make_in_specs(single_buffer):
            kw = {"pipeline_mode": pl.Buffered(1)} if single_buffer else {}
            return [
                pl.BlockSpec((bt, y_pad), lambda i: (i, 0)),
                pl.BlockSpec((y_pad, h_pad), lambda i: (0, 0), **kw),
                pl.BlockSpec((1, h_pad), lambda i: (0, 0), **kw),
                pl.BlockSpec((l_pad, h_pad, h_pad), lambda i: (0, 0, 0), **kw),
                pl.BlockSpec((l_pad, 1, h_pad), lambda i: (0, 0, 0), **kw),
            ]
    else:
        grid = (n_bt, n_layer + 1)
        dims = ("parallel", "arbitrary")
        out_spec = pl.BlockSpec((bt, h_pad), lambda i, k: (i, 0))
        scratch = [pltpu.VMEM((bt, h_pad), jnp.float32)]
        kernel = functools.partial(_trunknet_stream_kernel,
                                   compute_dtype=compute_dtype)

        def make_in_specs(single_buffer):
            kw = {"pipeline_mode": pl.Buffered(1)} if single_buffer else {}
            return [
                pl.BlockSpec((bt, y_pad), lambda i, k: (i, 0)),
                pl.BlockSpec((y_pad, h_pad), lambda i, k: (0, 0), **kw),
                pl.BlockSpec((1, h_pad), lambda i, k: (0, 0), **kw),
                pl.BlockSpec((1, h_pad, h_pad),
                             lambda i, k: (jnp.maximum(k - 1, 0), 0, 0)),
                pl.BlockSpec((1, 1, h_pad),
                             lambda i, k: (jnp.maximum(k - 1, 0), 0, 0)),
            ]

    def run(single_buffer):
        return pl.pallas_call(
            kernel,
            out_shape=jax.ShapeDtypeStruct((batch_pad, h_pad), jnp.float32),
            grid=grid,
            in_specs=make_in_specs(single_buffer),
            out_specs=out_spec,
            scratch_shapes=scratch,
            compiler_params=pltpu.CompilerParams(
                dimension_semantics=dims, vmem_limit_bytes=vmem_limit),
            cost_estimate=cost,
        )(y_p, w0_p, b0_p, ws_p, bs_p)

    try:
        out_p = run(True)   # single-buffer the constant-index weight blocks
    except Exception:       # pragma: no cover - jax without Buffered(1) support
        out_p = run(False)  # fall back to default (double) buffering

    return out_p[:batch, :hidden]


# ----------------------------------------------------------------------------
# Init + reference (for the self-test)
# ----------------------------------------------------------------------------
def init_trunknet_params(key, y_dim, hidden_size, n_layer):
    """Mimics torch.nn.Linear default init (U[-1/sqrt(fan_in), +])."""
    keys = jax.random.split(key, 2 + 2 * n_layer)
    bound0 = 1.0 / jnp.sqrt(y_dim)
    w0 = jax.random.uniform(keys[0], (y_dim, hidden_size), jnp.float32,
                            -bound0, bound0)
    b0 = jax.random.uniform(keys[1], (1, hidden_size), jnp.float32,
                            -bound0, bound0)
    boundh = 1.0 / jnp.sqrt(hidden_size)
    ws, bs = [], []
    for i in range(n_layer):
        ws.append(jax.random.uniform(keys[2 + 2 * i],
                                     (hidden_size, hidden_size), jnp.float32,
                                     -boundh, boundh))
        bs.append(jax.random.uniform(keys[3 + 2 * i],
                                     (1, hidden_size), jnp.float32,
                                     -boundh, boundh))
    return w0, b0, jnp.stack(ws, axis=0), jnp.stack(bs, axis=0)


def trunknet_ref(y, w0, b0, ws, bs, compute_dtype=jnp.bfloat16):
    """Pure-JAX reference matching the kernel's bf16-matmul / f32-accum math."""
    h = jnp.dot(y.astype(compute_dtype), w0.astype(compute_dtype),
                preferred_element_type=jnp.float32) + b0
    for i in range(ws.shape[0]):
        h = jnp.maximum(h, 0.0)
        h = jnp.dot(h.astype(compute_dtype), ws[i].astype(compute_dtype),
                    preferred_element_type=jnp.float32) + bs[i]
    return h


if __name__ == "__main__":
    y_dim, hidden_size, n_layer = 4, 32, 3
    batch = 8

    key = jax.random.PRNGKey(0)
    k_params, k_input = jax.random.split(key)

    w0, b0, ws, bs = init_trunknet_params(k_params, y_dim, hidden_size, n_layer)
    y = jax.random.normal(k_input, (batch, y_dim), jnp.float32)

    params, meta = prepare_trunknet_params(w0, b0, ws, bs)
    ref = trunknet_ref(y, w0, b0, ws, bs)

    # Resident-weight path (default at these sizes).
    out = jax.block_until_ready(trunknet_forward(y, params, meta))
    assert out.shape == (batch, hidden_size)
    assert jnp.allclose(out, ref, atol=1e-2, rtol=1e-2), \
        float(jnp.max(jnp.abs(out - ref)))

    # Per-layer weight-streaming path (auto-selected on v7x-sized configs);
    # exercised here explicitly for correctness.
    out_s = jax.block_until_ready(trunknet_forward(y, params, meta, stream=True))
    assert jnp.allclose(out_s, ref, atol=1e-2, rtol=1e-2), \
        float(jnp.max(jnp.abs(out_s - ref)))

    print("KERNEL_OK")
</pallas_src>

<mosaic_0001>
module attributes {stable_mosaic.version = 11 : i64} {
  func.func @_trunknet_resident_kernel(%arg0: i32, %arg1: memref<8x128xbf16, #tpu.memory_space<vmem>>, %arg2: memref<128x128xbf16, #tpu.memory_space<vmem>>, %arg3: memref<1x128xf32, #tpu.memory_space<vmem>>, %arg4: memref<3x128x128xbf16, #tpu.memory_space<vmem>>, %arg5: memref<3x1x128xf32, #tpu.memory_space<vmem>>, %arg6: memref<8x128xf32, #tpu.memory_space<vmem>>, %arg7: memref<8x128xbf16, #tpu.memory_space<vmem>>) attributes {dimension_semantics = [#tpu.dimension_semantics<parallel>], iteration_bounds = array<i64: 1>, scalar_prefetch = 0 : i64, scratch_operands = 1 : i64, tpu.core_type = #tpu.core_type<tc>, window_params = [{transform_indices = @transform_0, window_bounds = array<i64: 8, 128>}, {pipeline_mode = #tpu.pipeline_mode<synchronous>, transform_indices = @transform_1, window_bounds = array<i64: 128, 128>}, {pipeline_mode = #tpu.pipeline_mode<synchronous>, transform_indices = @transform_2, window_bounds = array<i64: 1, 128>}, {pipeline_mode = #tpu.pipeline_mode<synchronous>, transform_indices = @transform_3, window_bounds = array<i64: 3, 128, 128>}, {pipeline_mode = #tpu.pipeline_mode<synchronous>, transform_indices = @transform_4, window_bounds = array<i64: 3, 1, 128>}, {transform_indices = @transform_5, window_bounds = array<i64: 8, 128>}]} {
    %c0 = arith.constant 0 : index
    %c0_0 = arith.constant 0 : index
    %0 = vector.load %arg1[%c0, %c0_0] : memref<8x128xbf16, #tpu.memory_space<vmem>>, vector<8x128xbf16>
    %c0_1 = arith.constant 0 : index
    %c0_2 = arith.constant 0 : index
    %1 = vector.load %arg2[%c0_1, %c0_2] : memref<128x128xbf16, #tpu.memory_space<vmem>>, vector<128x128xbf16>
    %cst = arith.constant dense<0.000000e+00> : vector<8x128xf32>
    %2 = tpu.matmul %0, %1, %cst {dimension_numbers = #tpu.dot_dimension_numbers<[1], [0], [0], [1], [0, 0, 1, 1], [], []>} : vector<8x128xbf16>, vector<128x128xbf16>, vector<8x128xf32> -> vector<8x128xf32>
    %c0_3 = arith.constant 0 : index
    %c0_4 = arith.constant 0 : index
    %3 = vector.load %arg3[%c0_3, %c0_4] : memref<1x128xf32, #tpu.memory_space<vmem>>, vector<1x128xf32>
    %4 = vector.broadcast %3 : vector<1x128xf32> to vector<8x128xf32>
    %5 = arith.addf %2, %4 : vector<8x128xf32>
    %cst_5 = arith.constant 0.000000e+00 : f32
    %6 = vector.broadcast %cst_5 : f32 to vector<8x128xf32>
    %7 = arith.maximumf %5, %6 : vector<8x128xf32>
    %8 = arith.truncf %7 : vector<8x128xf32> to vector<8x128xbf16>
    %c0_6 = arith.constant 0 : index
    %c0_7 = arith.constant 0 : index
    %9 = vector.load %arg7[%c0_6, %c0_7] : memref<8x128xbf16, #tpu.memory_space<vmem>>, vector<8x128xbf16>
    tpu.vector_store %arg7[%c0_6, %c0_7], %8 {strides = array<i32>} : memref<8x128xbf16, #tpu.memory_space<vmem>>, vector<8x128xbf16>,
    %c0_8 = arith.constant 0 : index
    %c0_9 = arith.constant 0 : index
    %10 = vector.load %arg7[%c0_8, %c0_9] : memref<8x128xbf16, #tpu.memory_space<vmem>>, vector<8x128xbf16>
    %c0_10 = arith.constant 0 : index
    %c0_11 = arith.constant 0 : index
    %c0_12 = arith.constant 0 : index
    %11 = vector.load %arg4[%c0_10, %c0_11, %c0_12] : memref<3x128x128xbf16, #tpu.memory_space<vmem>>, vector<1x128x128xbf16>
    %12 = vector.shape_cast %11 : vector<1x128x128xbf16> to vector<128x128xbf16>
    %cst_13 = arith.constant dense<0.000000e+00> : vector<8x128xf32>
    %13 = tpu.matmul %10, %12, %cst_13 {dimension_numbers = #tpu.dot_dimension_numbers<[1], [0], [0], [1], [0, 0, 1, 1], [], []>} : vector<8x128xbf16>, vector<128x128xbf16>, vector<8x128xf32> -> vector<8x128xf32>
    %c0_14 = arith.constant 0 : index
    %c0_15 = arith.constant 0 : index
    %c0_16 = arith.constant 0 : index
    %14 = vector.load %arg5[%c0_14, %c0_15, %c0_16] : memref<3x1x128xf32, #tpu.memory_space<vmem>>, vector<1x1x128xf32>
    %15 = vector.shape_cast %14 : vector<1x1x128xf32> to vector<1x128xf32>
    %16 = vector.broadcast %15 : vector<1x128xf32> to vector<8x128xf32>
    %17 = arith.addf %13, %16 : vector<8x128xf32>
    %cst_17 = arith.constant 0.000000e+00 : f32
    %18 = vector.broadcast %cst_17 : f32 to vector<8x128xf32>
    %19 = arith.maximumf %17, %18 : vector<8x128xf32>
    %20 = arith.truncf %19 : vector<8x128xf32> to vector<8x128xbf16>
    %c0_18 = arith.constant 0 : index
    %c0_19 = arith.constant 0 : index
    %21 = vector.load %arg7[%c0_18, %c0_19] : memref<8x128xbf16, #tpu.memory_space<vmem>>, vector<8x128xbf16>
    tpu.vector_store %arg7[%c0_18, %c0_19], %20 {strides = array<i32>} : memref<8x128xbf16, #tpu.memory_space<vmem>>, vector<8x128xbf16>,
    %c0_20 = arith.constant 0 : index
    %c0_21 = arith.constant 0 : index
    %22 = vector.load %arg7[%c0_20, %c0_21] : memref<8x128xbf16, #tpu.memory_space<vmem>>, vector<8x128xbf16>
    %c1 = arith.constant 1 : index
    %c0_22 = arith.constant 0 : index
    %c0_23 = arith.constant 0 : index
    %23 = vector.load %arg4[%c1, %c0_22, %c0_23] : memref<3x128x128xbf16, #tpu.memory_space<vmem>>, vector<1x128x128xbf16>
    %24 = vector.shape_cast %23 : vector<1x128x128xbf16> to vector<128x128xbf16>
    %cst_24 = arith.constant dense<0.000000e+00> : vector<8x128xf32>
    %25 = tpu.matmul %22, %24, %cst_24 {dimension_numbers = #tpu.dot_dimension_numbers<[1], [0], [0], [1], [0, 0, 1, 1], [], []>} : vector<8x128xbf16>, vector<128x128xbf16>, vector<8x128xf32> -> vector<8x128xf32>
    %c1_25 = arith.constant 1 : index
    %c0_26 = arith.constant 0 : index
    %c0_27 = arith.constant 0 : index
    %26 = vector.load %arg5[%c1_25, %c0_26, %c0_27] : memref<3x1x128xf32, #tpu.memory_space<vmem>>, vector<1x1x128xf32>
    %27 = vector.shape_cast %26 : vector<1x1x128xf32> to vector<1x128xf32>
    %28 = vector.broadcast %27 : vector<1x128xf32> to vector<8x128xf32>
    %29 = arith.addf %25, %28 : vector<8x128xf32>
    %cst_28 = arith.constant 0.000000e+00 : f32
    %30 = vector.broadcast %cst_28 : f32 to vector<8x128xf32>
    %31 = arith.maximumf %29, %30 : vector<8x128xf32>
    %32 = arith.truncf %31 : vector<8x128xf32> to vector<8x128xbf16>
    %c0_29 = arith.constant 0 : index
    %c0_30 = arith.constant 0 : index
    %33 = vector.load %arg7[%c0_29, %c0_30] : memref<8x128xbf16, #tpu.memory_space<vmem>>, vector<8x128xbf16>
    tpu.vector_store %arg7[%c0_29, %c0_30], %32 {strides = array<i32>} : memref<8x128xbf16, #tpu.memory_space<vmem>>, vector<8x128xbf16>,
    %c0_31 = arith.constant 0 : index
    %c0_32 = arith.constant 0 : index
    %34 = vector.load %arg7[%c0_31, %c0_32] : memref<8x128xbf16, #tpu.memory_space<vmem>>, vector<8x128xbf16>
    %c2 = arith.constant 2 : index
    %c0_33 = arith.constant 0 : index
    %c0_34 = arith.constant 0 : index
    %35 = vector.load %arg4[%c2, %c0_33, %c0_34] : memref<3x128x128xbf16, #tpu.memory_space<vmem>>, vector<1x128x128xbf16>
    %36 = vector.shape_cast %35 : vector<1x128x128xbf16> to vector<128x128xbf16>
    %cst_35 = arith.constant dense<0.000000e+00> : vector<8x128xf32>
    %37 = tpu.matmul %34, %36, %cst_35 {dimension_numbers = #tpu.dot_dimension_numbers<[1], [0], [0], [1], [0, 0, 1, 1], [], []>} : vector<8x128xbf16>, vector<128x128xbf16>, vector<8x128xf32> -> vector<8x128xf32>
    %c2_36 = arith.constant 2 : index
    %c0_37 = arith.constant 0 : index
    %c0_38 = arith.constant 0 : index
    %38 = vector.load %arg5[%c2_36, %c0_37, %c0_38] : memref<3x1x128xf32, #tpu.memory_space<vmem>>, vector<1x1x128xf32>
    %39 = vector.shape_cast %38 : vector<1x1x128xf32> to vector<1x128xf32>
    %40 = vector.broadcast %39 : vector<1x128xf32> to vector<8x128xf32>
    %41 = arith.addf %37, %40 : vector<8x128xf32>
    %c0_39 = arith.constant 0 : index
    %c0_40 = arith.constant 0 : index
    %42 = vector.load %arg6[%c0_39, %c0_40] : memref<8x128xf32, #tpu.memory_space<vmem>>, vector<8x128xf32>
    tpu.vector_store %arg6[%c0_39, %c0_40], %41 {strides = array<i32>} : memref<8x128xf32, #tpu.memory_space<vmem>>, vector<8x128xf32>,
    return
  }
  func.func @transform_0(%arg0: i32) -> (i32, i32) {
    %c0_i32 = arith.constant 0 : i32
    %c0_i32_0 = arith.constant 0 : i32
    return %arg0, %c0_i32 : i32, i32
  }
  func.func @transform_1(%arg0: i32) -> (i32, i32) {
    %c0_i32 = arith.constant 0 : i32
    %c0_i32_0 = arith.constant 0 : i32
    %c0_i32_1 = arith.constant 0 : i32
    return %c0_i32, %c0_i32_0 : i32, i32
  }
  func.func @transform_2(%arg0: i32) -> (i32, i32) {
    %c0_i32 = arith.constant 0 : i32
    %c0_i32_0 = arith.constant 0 : i32
    %c0_i32_1 = arith.constant 0 : i32
    return %c0_i32, %c0_i32_0 : i32, i32
  }
  func.func @transform_3(%arg0: i32) -> (i32, i32, i32) {
    %c0_i32 = arith.constant 0 : i32
    %c0_i32_0 = arith.constant 0 : i32
    %c0_i32_1 = arith.constant 0 : i32
    %c0_i32_2 = arith.constant 0 : i32
    return %c0_i32, %c0_i32_0, %c0_i32_1 : i32, i32, i32
  }
  func.func @transform_4(%arg0: i32) -> (i32, i32, i32) {
    %c0_i32 = arith.constant 0 : i32
    %c0_i32_0 = arith.constant 0 : i32
    %c0_i32_1 = arith.constant 0 : i32
    %c0_i32_2 = arith.constant 0 : i32
    return %c0_i32, %c0_i32_0, %c0_i32_1 : i32, i32, i32
  }
  func.func @transform_5(%arg0: i32) -> (i32, i32) {
    %c0_i32 = arith.constant 0 : i32
    %c0_i32_0 = arith.constant 0 : i32
    return %arg0, %c0_i32 : i32, i32
  }
}

module attributes {stable_mosaic.version = 11 : i64} {
  func.func @_trunknet_resident_kernel(%arg0: i32, %arg1: memref<8x128xbf16, #tpu.memory_space<vmem>>, %arg2: memref<128x128xbf16, #tpu.memory_space<vmem>>, %arg3: memref<1x128xf32, #tpu.memory_space<vmem>>, %arg4: memref<3x128x128xbf16, #tpu.memory_space<vmem>>, %arg5: memref<3x1x128xf32, #tpu.memory_space<vmem>>, %arg6: memref<8x128xf32, #tpu.memory_space<vmem>>, %arg7: memref<8x128xbf16, #tpu.memory_space<vmem>>) attributes {dimension_semantics = [#tpu.dimension_semantics<parallel>], iteration_bounds = array<i64: 1>, scalar_prefetch = 0 : i64, scratch_operands = 1 : i64, tpu.core_type = #tpu.core_type<tc>, window_params = [{transform_indices = @transform_0, window_bounds = array<i64: 8, 128>}, {pipeline_mode = #tpu.pipeline_mode<synchronous>, transform_indices = @transform_1, window_bounds = array<i64: 128, 128>}, {pipeline_mode = #tpu.pipeline_mode<synchronous>, transform_indices = @transform_2, window_bounds = array<i64: 1, 128>}, {pipeline_mode = #tpu.pipeline_mode<synchronous>, transform_indices = @transform_3, window_bounds = array<i64: 3, 128, 128>}, {pipeline_mode = #tpu.pipeline_mode<synchronous>, transform_indices = @transform_4, window_bounds = array<i64: 3, 1, 128>}, {transform_indices = @transform_5, window_bounds = array<i64: 8, 128>}]} {
    %c0 = arith.constant 0 : index
    %c0_0 = arith.constant 0 : index
    %0 = vector.load %arg1[%c0, %c0_0] : memref<8x128xbf16, #tpu.memory_space<vmem>>, vector<8x128xbf16>
    %c0_1 = arith.constant 0 : index
    %c0_2 = arith.constant 0 : index
    %1 = vector.load %arg2[%c0_1, %c0_2] : memref<128x128xbf16, #tpu.memory_space<vmem>>, vector<128x128xbf16>
    %cst = arith.constant dense<0.000000e+00> : vector<8x128xf32>
    %2 = tpu.matmul %0, %1, %cst {dimension_numbers = #tpu.dot_dimension_numbers<[1], [0], [0], [1], [0, 0, 1, 1], [], []>} : vector<8x128xbf16>, vector<128x128xbf16>, vector<8x128xf32> -> vector<8x128xf32>
    %c0_3 = arith.constant 0 : index
    %c0_4 = arith.constant 0 : index
    %3 = vector.load %arg3[%c0_3, %c0_4] : memref<1x128xf32, #tpu.memory_space<vmem>>, vector<1x128xf32>
    %4 = vector.broadcast %3 : vector<1x128xf32> to vector<8x128xf32>
    %5 = arith.addf %2, %4 : vector<8x128xf32>
    %cst_5 = arith.constant 0.000000e+00 : f32
    %6 = vector.broadcast %cst_5 : f32 to vector<8x128xf32>
    %7 = arith.maximumf %5, %6 : vector<8x128xf32>
    %8 = arith.truncf %7 : vector<8x128xf32> to vector<8x128xbf16>
    %c0_6 = arith.constant 0 : index
    %c0_7 = arith.constant 0 : index
    %9 = vector.load %arg7[%c0_6, %c0_7] : memref<8x128xbf16, #tpu.memory_space<vmem>>, vector<8x128xbf16>
    tpu.vector_store %arg7[%c0_6, %c0_7], %8 {strides = array<i32>} : memref<8x128xbf16, #tpu.memory_space<vmem>>, vector<8x128xbf16>,
    %c0_8 = arith.constant 0 : index
    %c0_9 = arith.constant 0 : index
    %10 = vector.load %arg7[%c0_8, %c0_9] : memref<8x128xbf16, #tpu.memory_space<vmem>>, vector<8x128xbf16>
    %c0_10 = arith.constant 0 : index
    %c0_11 = arith.constant 0 : index
    %c0_12 = arith.constant 0 : index
    %11 = vector.load %arg4[%c0_10, %c0_11, %c0_12] : memref<3x128x128xbf16, #tpu.memory_space<vmem>>, vector<1x128x128xbf16>
    %12 = vector.shape_cast %11 : vector<1x128x128xbf16> to vector<128x128xbf16>
    %cst_13 = arith.constant dense<0.000000e+00> : vector<8x128xf32>
    %13 = tpu.matmul %10, %12, %cst_13 {dimension_numbers = #tpu.dot_dimension_numbers<[1], [0], [0], [1], [0, 0, 1, 1], [], []>} : vector<8x128xbf16>, vector<128x128xbf16>, vector<8x128xf32> -> vector<8x128xf32>
    %c0_14 = arith.constant 0 : index
    %c0_15 = arith.constant 0 : index
    %c0_16 = arith.constant 0 : index
    %14 = vector.load %arg5[%c0_14, %c0_15, %c0_16] : memref<3x1x128xf32, #tpu.memory_space<vmem>>, vector<1x1x128xf32>
    %15 = vector.shape_cast %14 : vector<1x1x128xf32> to vector<1x128xf32>
    %16 = vector.broadcast %15 : vector<1x128xf32> to vector<8x128xf32>
    %17 = arith.addf %13, %16 : vector<8x128xf32>
    %cst_17 = arith.constant 0.000000e+00 : f32
    %18 = vector.broadcast %cst_17 : f32 to vector<8x128xf32>
    %19 = arith.maximumf %17, %18 : vector<8x128xf32>
    %20 = arith.truncf %19 : vector<8x128xf32> to vector<8x128xbf16>
    %c0_18 = arith.constant 0 : index
    %c0_19 = arith.constant 0 : index
    %21 = vector.load %arg7[%c0_18, %c0_19] : memref<8x128xbf16, #tpu.memory_space<vmem>>, vector<8x128xbf16>
    tpu.vector_store %arg7[%c0_18, %c0_19], %20 {strides = array<i32>} : memref<8x128xbf16, #tpu.memory_space<vmem>>, vector<8x128xbf16>,
    %c0_20 = arith.constant 0 : index
    %c0_21 = arith.constant 0 : index
    %22 = vector.load %arg7[%c0_20, %c0_21] : memref<8x128xbf16, #tpu.memory_space<vmem>>, vector<8x128xbf16>
    %c1 = arith.constant 1 : index
    %c0_22 = arith.constant 0 : index
    %c0_23 = arith.constant 0 : index
    %23 = vector.load %arg4[%c1, %c0_22, %c0_23] : memref<3x128x128xbf16, #tpu.memory_space<vmem>>, vector<1x128x128xbf16>
    %24 = vector.shape_cast %23 : vector<1x128x128xbf16> to vector<128x128xbf16>
    %cst_24 = arith.constant dense<0.000000e+00> : vector<8x128xf32>
    %25 = tpu.matmul %22, %24, %cst_24 {dimension_numbers = #tpu.dot_dimension_numbers<[1], [0], [0], [1], [0, 0, 1, 1], [], []>} : vector<8x128xbf16>, vector<128x128xbf16>, vector<8x128xf32> -> vector<8x128xf32>
    %c1_25 = arith.constant 1 : index
    %c0_26 = arith.constant 0 : index
    %c0_27 = arith.constant 0 : index
    %26 = vector.load %arg5[%c1_25, %c0_26, %c0_27] : memref<3x1x128xf32, #tpu.memory_space<vmem>>, vector<1x1x128xf32>
    %27 = vector.shape_cast %26 : vector<1x1x128xf32> to vector<1x128xf32>
    %28 = vector.broadcast %27 : vector<1x128xf32> to vector<8x128xf32>
    %29 = arith.addf %25, %28 : vector<8x128xf32>
    %cst_28 = arith.constant 0.000000e+00 : f32
    %30 = vector.broadcast %cst_28 : f32 to vector<8x128xf32>
    %31 = arith.maximumf %29, %30 : vector<8x128xf32>
    %32 = arith.truncf %31 : vector<8x128xf32> to vector<8x128xbf16>
    %c0_29 = arith.constant 0 : index
    %c0_30 = arith.constant 0 : index
    %33 = vector.load %arg7[%c0_29, %c0_30] : memref<8x128xbf16, #tpu.memory_space<vmem>>, vector<8x128xbf16>
    tpu.vector_store %arg7[%c0_29, %c0_30], %32 {strides = array<i32>} : memref<8x128xbf16, #tpu.memory_space<vmem>>, vector<8x128xbf16>,
    %c0_31 = arith.constant 0 : index
    %c0_32 = arith.constant 0 : index
    %34 = vector.load %arg7[%c0_31, %c0_32] : memref<8x128xbf16, #tpu.memory_space<vmem>>, vector<8x128xbf16>
    %c2 = arith.constant 2 : index
    %c0_33 = arith.constant 0 : index
    %c0_34 = arith.constant 0 : index
    %35 = vector.load %arg4[%c2, %c0_33, %c0_34] : memref<3x128x128xbf16, #tpu.memory_space<vmem>>, vector<1x128x128xbf16>
    %36 = vector.shape_cast %35 : vector<1x128x128xbf16> to vector<128x128xbf16>
    %cst_35 = arith.constant dense<0.000000e+00> : vector<8x128xf32>
    %37 = tpu.matmul %34, %36, %cst_35 {dimension_numbers = #tpu.dot_dimension_numbers<[1], [0], [0], [1], [0, 0, 1, 1], [], []>} : vector<8x128xbf16>, vector<128x128xbf16>, vector<8x128xf32> -> vector<8x128xf32>
    %c2_36 = arith.constant 2 : index
    %c0_37 = arith.constant 0 : index
    %c0_38 = arith.constant 0 : index
    %38 = vector.load %arg5[%c2_36, %c0_37, %c0_38] : memref<3x1x128xf32, #tpu.memory_space<vmem>>, vector<1x1x128xf32>
    %39 = vector.shape_cast %38 : vector<1x1x128xf32> to vector<1x128xf32>
    %40 = vector.broadcast %39 : vector<1x128xf32> to vector<8x128xf32>
    %41 = arith.addf %37, %40 : vector<8x128xf32>
    %c0_39 = arith.constant 0 : index
    %c0_40 = arith.constant 0 : index
    %42 = vector.load %arg6[%c0_39, %c0_40] : memref<8x128xf32, #tpu.memory_space<vmem>>, vector<8x128xf32>
    tpu.vector_store %arg6[%c0_39, %c0_40], %41 {strides = array<i32>} : memref<8x128xf32, #tpu.memory_space<vmem>>, vector<8x128xf32>,
    return
  }
  func.func @transform_0(%arg0: i32) -> (i32, i32) {
    %c0_i32 = arith.constant 0 : i32
    %c0_i32_0 = arith.constant 0 : i32
    return %arg0, %c0_i32 : i32, i32
  }
  func.func @transform_1(%arg0: i32) -> (i32, i32) {
    %c0_i32 = arith.constant 0 : i32
    %c0_i32_0 = arith.constant 0 : i32
    %c0_i32_1 = arith.constant 0 : i32
    return %c0_i32, %c0_i32_0 : i32, i32
  }
  func.func @transform_2(%arg0: i32) -> (i32, i32) {
    %c0_i32 = arith.constant 0 : i32
    %c0_i32_0 = arith.constant 0 : i32
    %c0_i32_1 = arith.constant 0 : i32
    return %c0_i32, %c0_i32_0 : i32, i32
  }
  func.func @transform_3(%arg0: i32) -> (i32, i32, i32) {
    %c0_i32 = arith.constant 0 : i32
    %c0_i32_0 = arith.constant 0 : i32
    %c0_i32_1 = arith.constant 0 : i32
    %c0_i32_2 = arith.constant 0 : i32
    return %c0_i32, %c0_i32_0, %c0_i32_1 : i32, i32, i32
  }
  func.func @transform_4(%arg0: i32) -> (i32, i32, i32) {
    %c0_i32 = arith.constant 0 : i32
    %c0_i32_0 = arith.constant 0 : i32
    %c0_i32_1 = arith.constant 0 : i32
    %c0_i32_2 = arith.constant 0 : i32
    return %c0_i32, %c0_i32_0, %c0_i32_1 : i32, i32, i32
  }
  func.func @transform_5(%arg0: i32) -> (i32, i32) {
    %c0_i32 = arith.constant 0 : i32
    %c0_i32_0 = arith.constant 0 : i32
    return %arg0, %c0_i32 : i32, i32
  }
}

</mosaic_0001>

<llo_original>
// kernel: tpu_custom_call.1
$region0: #{tpu_custom_call.1}
  #allocation0 [shape = 'u32[]', space=smem, size = 0x4, offset = 0x4, fixed_abs, tag = 'smem constant byte address 0x4 - core index']
  #allocation1 [shape = 'u32[72,128]{1,0:T(1,128)}', space=vmem, size = 0x9000, scoped, tag = 'internal scratch']
  #allocation2 [shape = 'bf16[8,128]{1,0:T(8,128)(2,1)}', space=vmem, size = 0x800, scoped, tag = 'scratch operand']
  %s0 = inlined_call_operand.hbm [shape: bf16[8,128], index: 0, kind: input, shape index: {}]
  %s1 = inlined_call_operand.hbm [shape: bf16[128,128], index: 1, kind: input, shape index: {}]
  %s2 = inlined_call_operand.hbm [shape: f32[1,128], index: 2, kind: input, shape index: {}]
  %s3 = inlined_call_operand.hbm [shape: bf16[3,128,128], index: 3, kind: input, shape index: {}]
  %s4 = inlined_call_operand.vmem [shape: f32[3,1,128], index: 4, kind: input, shape index: {}]
  %s5 = inlined_call_operand.hbm [shape: f32[8,128], index: 5, kind: output, shape index: {}]
  %s6 = sld [smem:[#allocation0]]
  $region46: #{tpu_custom_call.1} parent=0
    _
  %s8 = ssub.s32 1, %s6
  %s9 = scalar_select 0, %s8, %s6
  $region1: #{tpu_custom_call.1} parent=0
    #allocation3 [shape = 'u8[2048]{0}', space=vmem, size = 0x800, scoped, tag = 'input window, operand 0, single buffered']
    #allocation4 [shape = 's32[1]{0}', space=sflag, size = 0x4, scoped, tag = 'scoped memory for tpu_custom_call.1']
    #allocation5 [shape = 's32[1]{0}', space=sflag, size = 0x4, scoped, tag = 'scoped memory for tpu_custom_call.1']
    #allocation6 [shape = 'u8[32768]{0}', space=vmem, size = 0x8000, scoped, tag = 'input window, operand 1, single buffered']
    #allocation7 [shape = 's32[1]{0}', space=sflag, size = 0x4, scoped, tag = 'scoped memory for tpu_custom_call.1']
    #allocation8 [shape = 'u8[512]{0}', space=vmem, size = 0x400, scoped, tag = 'input window, operand 2, single buffered']
    #allocation9 [shape = 'u8[98304]{0}', space=vmem, size = 0x18000, scoped, tag = 'input window, operand 3, single buffered']
    #allocation10 [shape = 's32[1]{0}', space=sflag, size = 0x4, scoped, tag = 'scoped memory for tpu_custom_call.1']
    #allocation11 [shape = 'u8[4096]{0}', space=vmem, size = 0x1000, scoped, tag = 'output window, operand 0, single buffered']
    %10 = vsyncpa [#allocation4], 0
    %11 = vsyncpa [#allocation7], 0
    %12 = vsyncpa [#allocation10], 0
    %13 = vsyncpa [#allocation5], 0
    // Predicated region
    $region2: #{tpu_custom_call.1} parent=1 // pred_check
      _
    $region3: #{tpu_custom_call.1} parent=1 // pred_check_branch
      %15 = sbr.rel (0) target = $region5
    $region4: #{tpu_custom_call.1} parent=1 // pred_region
      %17 = vsyncadd [#allocation4], 0
      %s19 = sshll.u32 %s0, 4
      %s20 = int_to_ptr.hbm [resolvable:$true] %s19
      %s21 = sshll.u32 [#allocation3], 4
      %s22 = int_to_ptr.vmem [resolvable:$true] %s21
      %24 = dma.hbm_to_vmem [thread:$0]  %s20, 64, %s22, [#allocation4]
    $region5: #{tpu_custom_call.1} parent=1 // pred_fallthru
      _
    // Predicated region
    $region6: #{tpu_custom_call.1} parent=1 // pred_check
      _
    $region7: #{tpu_custom_call.1} parent=1 // pred_check_branch
      %26 = sbr.rel (0) target = $region9
    $region8: #{tpu_custom_call.1} parent=1 // pred_region
      %28 = vsyncadd [#allocation7], 0
      %s29 = sshll.u32 %s1, 4
      %s30 = int_to_ptr.hbm [resolvable:$true] %s29
      %s31 = sshll.u32 [#allocation6], 4
      %s32 = int_to_ptr.vmem [resolvable:$true] %s31
      %37 = dma.hbm_to_vmem [thread:$0]  %s30, 1024, %s32, [#allocation7], 64, 64, 4
    $region9: #{tpu_custom_call.1} parent=1 // pred_fallthru
      _
    // Predicated region
    $region10: #{tpu_custom_call.1} parent=1 // pred_check
      _
    $region11: #{tpu_custom_call.1} parent=1 // pred_check_branch
      %39 = sbr.rel (0) target = $region13
    $region12: #{tpu_custom_call.1} parent=1 // pred_region
      %41 = vsyncadd [#allocation7], 0
      %s43 = sshll.u32 %s2, 4
      %s44 = int_to_ptr.hbm [resolvable:$true] %s43
      %s45 = sshll.u32 [#allocation8], 4
      %s46 = int_to_ptr.vmem [resolvable:$true] %s45
      %48 = dma.hbm_to_vmem [thread:$0]  %s44, 16, %s46, [#allocation7]
    $region13: #{tpu_custom_call.1} parent=1 // pred_fallthru
      _
    // Predicated region
    $region14: #{tpu_custom_call.1} parent=1 // pred_check
      _
    $region15: #{tpu_custom_call.1} parent=1 // pred_check_branch
      %50 = sbr.rel (0) target = $region17
    $region16: #{tpu_custom_call.1} parent=1 // pred_region
      %52 = vsyncadd [#allocation10], 0
      %s53 = sshll.u32 %s3, 4
      %s54 = int_to_ptr.hbm [resolvable:$true] %s53
      %s55 = sshll.u32 [#allocation9], 4
      %s56 = int_to_ptr.vmem [resolvable:$true] %s55
      %61 = dma.hbm_to_vmem [thread:$0]  %s54, 3072, %s56, [#allocation10], 64, 64, 4
    $region17: #{tpu_custom_call.1} parent=1 // pred_fallthru
      _
    // Predicated region
    $region18: #{tpu_custom_call.1} parent=1 // pred_check
      _
    $region19: #{tpu_custom_call.1} parent=1 // pred_check_branch
      %63 = sbr.rel (0) target = $region21
    $region20: #{tpu_custom_call.1} parent=1 // pred_region
      _
    $region21: #{tpu_custom_call.1} parent=1 // pred_fallthru
      _
    // Predicated region
    $region22: #{tpu_custom_call.1} parent=1 // pred_check
      _
    $region23: #{tpu_custom_call.1} parent=1 // pred_check_branch
      %65 = sbr.rel (0) target = $region25
    $region24: #{tpu_custom_call.1} parent=1 // pred_region
      %67 = dma.done [#allocation4], 64
    $region25: #{tpu_custom_call.1} parent=1 // pred_fallthru
      _
    // Predicated region
    $region26: #{tpu_custom_call.1} parent=1 // pred_check
      _
    $region27: #{tpu_custom_call.1} parent=1 // pred_check_branch
      %69 = sbr.rel (0) target = $region29
    $region28: #{tpu_custom_call.1} parent=1 // pred_region
      %71 = dma.done [#allocation7], 1024
    $region29: #{tpu_custom_call.1} parent=1 // pred_fallthru
      _
    // Predicated region
    $region30: #{tpu_custom_call.1} parent=1 // pred_check
      _
    $region31: #{tpu_custom_call.1} parent=1 // pred_check_branch
      %73 = sbr.rel (0) target = $region33
    $region32: #{tpu_custom_call.1} parent=1 // pred_region
      %75 = dma.done [#allocation7], 16
    $region33: #{tpu_custom_call.1} parent=1 // pred_fallthru
      _
    // Predicated region
    $region34: #{tpu_custom_call.1} parent=1 // pred_check
      _
    $region35: #{tpu_custom_call.1} parent=1 // pred_check_branch
      %77 = sbr.rel (0) target = $region37
    $region36: #{tpu_custom_call.1} parent=1 // pred_region
      %79 = dma.done [#allocation10], 3072
    $region37: #{tpu_custom_call.1} parent=1 // pred_fallthru
      _
    %v80 = vld [vmem:[#allocation3] sm:$0xf]
    %v81 = vld [vmem:[#allocation6] sm:$0xf]
    %v82 = vld [vmem:[#allocation6 + $0x4] sm:$0xf]
    %v83 = vld [vmem:[#allocation6 + $0x8] sm:$0xf]
    %v84 = vld [vmem:[#allocation6 + $0xc] sm:$0xf]
    %v85 = vld [vmem:[#allocation6 + $0x10] sm:$0xf]
    %v86 = vld [vmem:[#allocation6 + $0x14] sm:$0xf]
    %v87 = vld [vmem:[#allocation6 + $0x18] sm:$0xf]
    %v88 = vld [vmem:[#allocation6 + $0x1c] sm:$0xf]
    %v89 = vld [vmem:[#allocation6 + $0x20] sm:$0xf]
    %v90 = vld [vmem:[#allocation6 + $0x24] sm:$0xf]
    %v91 = vld [vmem:[#allocation6 + $0x28] sm:$0xf]
    %v92 = vld [vmem:[#allocation6 + $0x2c] sm:$0xf]
    %v93 = vld [vmem:[#allocation6 + $0x30] sm:$0xf]
    %v94 = vld [vmem:[#allocation6 + $0x34] sm:$0xf]
    %v95 = vld [vmem:[#allocation6 + $0x38] sm:$0xf]
    %v96 = vld [vmem:[#allocation6 + $0x3c] sm:$0xf]
    %v97 = vld [vmem:[#allocation8] sm:$0x1]
    %v99 = vperm.slane %v97, 0
    %v117 = vunpack.c.l.b16 %v81
    %v118 = vunpack.c.l.b16 %v82
    %v119 = vunpack.c.l.b16 %v83
    %v120 = vunpack.c.l.b16 %v84
    %v121 = vunpack.c.l.b16 %v85
    %v122 = vunpack.c.l.b16 %v86
    %v123 = vunpack.c.l.b16 %v87
    %v124 = vunpack.c.l.b16 %v88
    %v125 = vunpack.c.l.b16 %v89
    %v126 = vunpack.c.l.b16 %v90
    %v127 = vunpack.c.l.b16 %v91
    %v128 = vunpack.c.l.b16 %v92
    %v129 = vunpack.c.l.b16 %v93
    %v130 = vunpack.c.l.b16 %v94
    %v131 = vunpack.c.l.b16 %v95
    %v132 = vunpack.c.l.b16 %v96
    %v133 = vpack.c.b16 %v118, %v117
    %v134 = vpack.c.b16 %v120, %v119
    %v135 = vpack.c.b16 %v122, %v121
    %v136 = vpack.c.b16 %v124, %v123
    %v137 = vpack.c.b16 %v126, %v125
    %v138 = vpack.c.b16 %v128, %v127
    %v139 = vpack.c.b16 %v130, %v129
    %v140 = vpack.c.b16 %v132, %v131
    %149 = vmatpush.bf16.msra.mxu0 %v140
    %150 = vmatpush.bf16.msra.mxu0 %v139
    %151 = vmatpush.bf16.msra.mxu0 %v138
    %152 = vmatpush.bf16.msra.mxu0 %v137
    %153 = vmatpush.bf16.msra.mxu0 %v136
    %154 = vmatpush.bf16.msra.mxu0 %v135
    %155 = vmatpush.bf16.msra.mxu0 %v134
    %156 = vmatpush.bf16.msra.mxu0 %v133
    %157 = vmatmul.bf16.gmra.mxu0 %v80
    %v158 = vpop.f32.mrf.mxu0
    %v159 = vadd.f32 %v99, %v158
    %v160 = vpop.f32.mrf.mxu0
    %161 = vdwg.mxu0
    %v162 = vmax.f32 %v159, 0.0
    %v163 = vpack.c.bf16 %v162, %v162
    %164 = vst [vmem:[#allocation2] sm:$0xf] %v163
    %v165 = vld [vmem:[#allocation2] sm:$0xf]
    %v166 = vld [vmem:[#allocation9] sm:$0xf]
    %v167 = vld [vmem:[#allocation9 + $0x4] sm:$0xf]
    %v168 = vld [vmem:[#allocation9 + $0x8] sm:$0xf]
    %v169 = vld [vmem:[#allocation9 + $0xc] sm:$0xf]
    %v170 = vld [vmem:[#allocation9 + $0x10] sm:$0xf]
    %v171 = vld [vmem:[#allocation9 + $0x14] sm:$0xf]
    %v172 = vld [vmem:[#allocation9 + $0x18] sm:$0xf]
    %v173 = vld [vmem:[#allocation9 + $0x1c] sm:$0xf]
    %v174 = vld [vmem:[#allocation9 + $0x20] sm:$0xf]
    %v175 = vld [vmem:[#allocation9 + $0x24] sm:$0xf]
    %v176 = vld [vmem:[#allocation9 + $0x28] sm:$0xf]
    %v177 = vld [vmem:[#allocation9 + $0x2c] sm:$0xf]
    %v178 = vld [vmem:[#allocation9 + $0x30] sm:$0xf]
    %v179 = vld [vmem:[#allocation9 + $0x34] sm:$0xf]
    %v180 = vld [vmem:[#allocation9 + $0x38] sm:$0xf]
    %v181 = vld [vmem:[#allocation9 + $0x3c] sm:$0xf]
    %v182 = vld [vmem:[%s4] sm:$0x1]
    %v184 = vperm.slane %v182, 0
    %v202 = vunpack.c.l.b16 %v166
    %v203 = vunpack.c.l.b16 %v167
    %v204 = vunpack.c.l.b16 %v168
    %v205 = vunpack.c.l.b16 %v169
    %v206 = vunpack.c.l.b16 %v170
    %v207 = vunpack.c.l.b16 %v171
    %v208 = vunpack.c.l.b16 %v172
    %v209 = vunpack.c.l.b16 %v173
    %v210 = vunpack.c.l.b16 %v174
    %v211 = vunpack.c.l.b16 %v175
    %v212 = vunpack.c.l.b16 %v176
    %v213 = vunpack.c.l.b16 %v177
    %v214 = vunpack.c.l.b16 %v178
    %v215 = vunpack.c.l.b16 %v179
    %v216 = vunpack.c.l.b16 %v180
    %v217 = vunpack.c.l.b16 %v181
    %v218 = vpack.c.b16 %v203, %v202
    %v219 = vpack.c.b16 %v205, %v204
    %v220 = vpack.c.b16 %v207, %v206
    %v221 = vpack.c.b16 %v209, %v208
    %v222 = vpack.c.b16 %v211, %v210
    %v223 = vpack.c.b16 %v213, %v212
    %v224 = vpack.c.b16 %v215, %v214
    %v225 = vpack.c.b16 %v217, %v216
    %234 = vmatpush.bf16.msra.mxu0 %v225
    %235 = vmatpush.bf16.msra.mxu0 %v224
    %236 = vmatpush.bf16.msra.mxu0 %v223
    %237 = vmatpush.bf16.msra.mxu0 %v222
    %238 = vmatpush.bf16.msra.mxu0 %v221
    %239 = vmatpush.bf16.msra.mxu0 %v220
    %240 = vmatpush.bf16.msra.mxu0 %v219
    %241 = vmatpush.bf16.msra.mxu0 %v218
    %242 = vmatmul.bf16.gmra.mxu0 %v165
    %v243 = vpop.f32.mrf.mxu0
    %v244 = vadd.f32 %v184, %v243
    %v245 = vpop.f32.mrf.mxu0
    %246 = vdwg.mxu0
    %v247 = vmax.f32 %v244, 0.0
    %v248 = vpack.c.bf16 %v247, %v247
    %249 = vst [vmem:[#allocation2] sm:$0xf] %v248
    %v250 = vld [vmem:[#allocation2] sm:$0xf]
    %s251 = scalar_lea.vmem [#allocation9], 64
    %v252 = vld [vmem:[%s251] sm:$0xf]
    %v253 = vld [vmem:[%s251 + $0x4] sm:$0xf]
    %v254 = vld [vmem:[%s251 + $0x8] sm:$0xf]
    %v255 = vld [vmem:[%s251 + $0xc] sm:$0xf]
    %v256 = vld [vmem:[%s251 + $0x10] sm:$0xf]
    %v257 = vld [vmem:[%s251 + $0x14] sm:$0xf]
    %v258 = vld [vmem:[%s251 + $0x18] sm:$0xf]
    %v259 = vld [vmem:[%s251 + $0x1c] sm:$0xf]
    %v260 = vld [vmem:[%s251 + $0x20] sm:$0xf]
    %v261 = vld [vmem:[%s251 + $0x24] sm:$0xf]
    %v262 = vld [vmem:[%s251 + $0x28] sm:$0xf]
    %v263 = vld [vmem:[%s251 + $0x2c] sm:$0xf]
    %v264 = vld [vmem:[%s251 + $0x30] sm:$0xf]
    %v265 = vld [vmem:[%s251 + $0x34] sm:$0xf]
    %v266 = vld [vmem:[%s251 + $0x38] sm:$0xf]
    %v267 = vld [vmem:[%s251 + $0x3c] sm:$0xf]
    %s268 = scalar_lea.vmem %s4, 1
    %v269 = vld [vmem:[%s268] sm:$0x1]
    %v271 = vperm.slane %v269, 0
    %v289 = vunpack.c.l.b16 %v252
    %v290 = vunpack.c.l.b16 %v253
    %v291 = vunpack.c.l.b16 %v254
    %v292 = vunpack.c.l.b16 %v255
    %v293 = vunpack.c.l.b16 %v256
    %v294 = vunpack.c.l.b16 %v257
    %v295 = vunpack.c.l.b16 %v258
    %v296 = vunpack.c.l.b16 %v259
    %v297 = vunpack.c.l.b16 %v260
    %v298 = vunpack.c.l.b16 %v261
    %v299 = vunpack.c.l.b16 %v262
    %v300 = vunpack.c.l.b16 %v263
    %v301 = vunpack.c.l.b16 %v264
    %v302 = vunpack.c.l.b16 %v265
    %v303 = vunpack.c.l.b16 %v266
    %v304 = vunpack.c.l.b16 %v267
    %v305 = vpack.c.b16 %v290, %v289
    %v306 = vpack.c.b16 %v292, %v291
    %v307 = vpack.c.b16 %v294, %v293
    %v308 = vpack.c.b16 %v296, %v295
    %v309 = vpack.c.b16 %v298, %v297
    %v310 = vpack.c.b16 %v300, %v299
    %v311 = vpack.c.b16 %v302, %v301
    %v312 = vpack.c.b16 %v304, %v303
    %321 = vmatpush.bf16.msra.mxu0 %v312
    %322 = vmatpush.bf16.msra.mxu0 %v311
    %323 = vmatpush.bf16.msra.mxu0 %v310
    %324 = vmatpush.bf16.msra.mxu0 %v309
    %325 = vmatpush.bf16.msra.mxu0 %v308
    %326 = vmatpush.bf16.msra.mxu0 %v307
    %327 = vmatpush.bf16.msra.mxu0 %v306
    %328 = vmatpush.bf16.msra.mxu0 %v305
    %329 = vmatmul.bf16.gmra.mxu0 %v250
    %v330 = vpop.f32.mrf.mxu0
    %v331 = vadd.f32 %v271, %v330
    %v332 = vpop.f32.mrf.mxu0
    %333 = vdwg.mxu0
    %v334 = vmax.f32 %v331, 0.0
    %v335 = vpack.c.bf16 %v334, %v334
    %336 = vst [vmem:[#allocation2] sm:$0xf] %v335
    %v337 = vld [vmem:[#allocation2] sm:$0xf]
    %s338 = scalar_lea.vmem [#allocation9], 128
    %v339 = vld [vmem:[%s338] sm:$0xf]
    %v340 = vld [vmem:[%s338 + $0x4] sm:$0xf]
    %v341 = vld [vmem:[%s338 + $0x8] sm:$0xf]
    %v342 = vld [vmem:[%s338 + $0xc] sm:$0xf]
    %v343 = vld [vmem:[%s338 + $0x10] sm:$0xf]
    %v344 = vld [vmem:[%s338 + $0x14] sm:$0xf]
    %v345 = vld [vmem:[%s338 + $0x18] sm:$0xf]
    %v346 = vld [vmem:[%s338 + $0x1c] sm:$0xf]
    %v347 = vld [vmem:[%s338 + $0x20] sm:$0xf]
    %v348 = vld [vmem:[%s338 + $0x24] sm:$0xf]
    %v349 = vld [vmem:[%s338 + $0x28] sm:$0xf]
    %v350 = vld [vmem:[%s338 + $0x2c] sm:$0xf]
    %v351 = vld [vmem:[%s338 + $0x30] sm:$0xf]
    %v352 = vld [vmem:[%s338 + $0x34] sm:$0xf]
    %v353 = vld [vmem:[%s338 + $0x38] sm:$0xf]
    %v354 = vld [vmem:[%s338 + $0x3c] sm:$0xf]
    %s355 = scalar_lea.vmem %s4, 2
    %v356 = vld [vmem:[%s355] sm:$0x1]
    %v358 = vperm.slane %v356, 0
    %v376 = vunpack.c.l.b16 %v339
    %v377 = vunpack.c.l.b16 %v340
    %v378 = vunpack.c.l.b16 %v341
    %v379 = vunpack.c.l.b16 %v342
    %v380 = vunpack.c.l.b16 %v343
    %v381 = vunpack.c.l.b16 %v344
    %v382 = vunpack.c.l.b16 %v345
    %v383 = vunpack.c.l.b16 %v346
    %v384 = vunpack.c.l.b16 %v347
    %v385 = vunpack.c.l.b16 %v348
    %v386 = vunpack.c.l.b16 %v349
    %v387 = vunpack.c.l.b16 %v350
    %v388 = vunpack.c.l.b16 %v351
    %v389 = vunpack.c.l.b16 %v352
    %v390 = vunpack.c.l.b16 %v353
    %v391 = vunpack.c.l.b16 %v354
    %v392 = vpack.c.b16 %v377, %v376
    %v393 = vpack.c.b16 %v379, %v378
    %v394 = vpack.c.b16 %v381, %v380
    %v395 = vpack.c.b16 %v383, %v382
    %v396 = vpack.c.b16 %v385, %v384
    %v397 = vpack.c.b16 %v387, %v386
    %v398 = vpack.c.b16 %v389, %v388
    %v399 = vpack.c.b16 %v391, %v390
    %408 = vmatpush.bf16.msra.mxu0 %v399
    %409 = vmatpush.bf16.msra.mxu0 %v398
    %410 = vmatpush.bf16.msra.mxu0 %v397
    %411 = vmatpush.bf16.msra.mxu0 %v396
    %412 = vmatpush.bf16.msra.mxu0 %v395
    %413 = vmatpush.bf16.msra.mxu0 %v394
    %414 = vmatpush.bf16.msra.mxu0 %v393
    %415 = vmatpush.bf16.msra.mxu0 %v392
    %416 = vmatmul.bf16.gmra.mxu0 %v337
    %v417 = vpop.f32.mrf.mxu0
    %v418 = vadd.f32 %v358, %v417
    %v419 = vpop.f32.mrf.mxu0
    %420 = vdwg.mxu0
    %421 = vst [vmem:[#allocation11] sm:$0xff] %v418
    // Predicated region
    $region38: #{tpu_custom_call.1} parent=1 // pred_check
      _
    $region39: #{tpu_custom_call.1} parent=1 // pred_check_branch
      %423 = sbr.rel (0) target = $region41
    $region40: #{tpu_custom_call.1} parent=1 // pred_region
      %425 = vsyncadd [#allocation5], 0
      %s427 = sshll.u32 [#allocation11], 4
      %s428 = int_to_ptr.vmem [resolvable:$true] %s427
      %s429 = sshll.u32 %s5, 4
      %s430 = int_to_ptr.hbm [resolvable:$true] %s429
      %432 = dma.vmem_to_hbm [thread:$0]  %s428, 128, %s430, [#allocation5]
    $region41: #{tpu_custom_call.1} parent=1 // pred_fallthru
      _
    // Predicated region
    $region42: #{tpu_custom_call.1} parent=1 // pred_check
      _
    $region43: #{tpu_custom_call.1} parent=1 // pred_check_branch
      %434 = sbr.rel (0) target = $region45
    $region44: #{tpu_custom_call.1} parent=1 // pred_region
      %436 = dma.done [#allocation5], 128
    $region45: #{tpu_custom_call.1} parent=1 // pred_fallthru
      _
    %437 = vsyncpa [#allocation4], 1
    %438 = vsyncpa [#allocation7], 1
    %439 = vsyncpa [#allocation10], 1
    %440 = vsyncpa [#allocation5], 1

// kernel: tpu_custom_call.1
$region0: #{tpu_custom_call.1}
  #allocation0 [shape = 'u32[]', space=smem, size = 0x4, offset = 0x4, fixed_abs, tag = 'smem constant byte address 0x4 - core index']
  #allocation1 [shape = 'u32[72,128]{1,0:T(1,128)}', space=vmem, size = 0x9000, scoped, tag = 'internal scratch']
  #allocation2 [shape = 'bf16[8,128]{1,0:T(8,128)(2,1)}', space=vmem, size = 0x800, scoped, tag = 'scratch operand']
  %s0 = inlined_call_operand.hbm [shape: bf16[8,128], index: 0, kind: input, shape index: {}]
  %s1 = inlined_call_operand.hbm [shape: bf16[128,128], index: 1, kind: input, shape index: {}]
  %s2 = inlined_call_operand.hbm [shape: f32[1,128], index: 2, kind: input, shape index: {}]
  %s3 = inlined_call_operand.hbm [shape: bf16[3,128,128], index: 3, kind: input, shape index: {}]
  %s4 = inlined_call_operand.vmem [shape: f32[3,1,128], index: 4, kind: input, shape index: {}]
  %s5 = inlined_call_operand.hbm [shape: f32[8,128], index: 5, kind: output, shape index: {}]
  %s6 = sld [smem:[#allocation0]]
  $region46: #{tpu_custom_call.1} parent=0
    _
  %s8 = ssub.s32 1, %s6
  %s9 = scalar_select 0, %s8, %s6
  $region1: #{tpu_custom_call.1} parent=0
    #allocation3 [shape = 'u8[2048]{0}', space=vmem, size = 0x800, scoped, tag = 'input window, operand 0, single buffered']
    #allocation4 [shape = 's32[1]{0}', space=sflag, size = 0x4, scoped, tag = 'scoped memory for tpu_custom_call.1']
    #allocation5 [shape = 's32[1]{0}', space=sflag, size = 0x4, scoped, tag = 'scoped memory for tpu_custom_call.1']
    #allocation6 [shape = 'u8[32768]{0}', space=vmem, size = 0x8000, scoped, tag = 'input window, operand 1, single buffered']
    #allocation7 [shape = 's32[1]{0}', space=sflag, size = 0x4, scoped, tag = 'scoped memory for tpu_custom_call.1']
    #allocation8 [shape = 'u8[512]{0}', space=vmem, size = 0x400, scoped, tag = 'input window, operand 2, single buffered']
    #allocation9 [shape = 'u8[98304]{0}', space=vmem, size = 0x18000, scoped, tag = 'input window, operand 3, single buffered']
    #allocation10 [shape = 's32[1]{0}', space=sflag, size = 0x4, scoped, tag = 'scoped memory for tpu_custom_call.1']
    #allocation11 [shape = 'u8[4096]{0}', space=vmem, size = 0x1000, scoped, tag = 'output window, operand 0, single buffered']
    %10 = vsyncpa [#allocation4], 0
    %11 = vsyncpa [#allocation7], 0
    %12 = vsyncpa [#allocation10], 0
    %13 = vsyncpa [#allocation5], 0
    // Predicated region
    $region2: #{tpu_custom_call.1} parent=1 // pred_check
      _
    $region3: #{tpu_custom_call.1} parent=1 // pred_check_branch
      %15 = sbr.rel (0) target = $region5
    $region4: #{tpu_custom_call.1} parent=1 // pred_region
      %17 = vsyncadd [#allocation4], 0
      %s19 = sshll.u32 %s0, 4
      %s20 = int_to_ptr.hbm [resolvable:$true] %s19
      %s21 = sshll.u32 [#allocation3], 4
      %s22 = int_to_ptr.vmem [resolvable:$true] %s21
      %24 = dma.hbm_to_vmem [thread:$0]  %s20, 64, %s22, [#allocation4]
    $region5: #{tpu_custom_call.1} parent=1 // pred_fallthru
      _
    // Predicated region
    $region6: #{tpu_custom_call.1} parent=1 // pred_check
      _
    $region7: #{tpu_custom_call.1} parent=1 // pred_check_branch
      %26 = sbr.rel (0) target = $region9
    $region8: #{tpu_custom_call.1} parent=1 // pred_region
      %28 = vsyncadd [#allocation7], 0
      %s29 = sshll.u32 %s1, 4
      %s30 = int_to_ptr.hbm [resolvable:$true] %s29
      %s31 = sshll.u32 [#allocation6], 4
      %s32 = int_to_ptr.vmem [resolvable:$true] %s31
      %37 = dma.hbm_to_vmem [thread:$0]  %s30, 1024, %s32, [#allocation7], 64, 64, 4
    $region9: #{tpu_custom_call.1} parent=1 // pred_fallthru
      _
    // Predicated region
    $region10: #{tpu_custom_call.1} parent=1 // pred_check
      _
    $region11: #{tpu_custom_call.1} parent=1 // pred_check_branch
      %39 = sbr.rel (0) target = $region13
    $region12: #{tpu_custom_call.1} parent=1 // pred_region
      %41 = vsyncadd [#allocation7], 0
      %s43 = sshll.u32 %s2, 4
      %s44 = int_to_ptr.hbm [resolvable:$true] %s43
      %s45 = sshll.u32 [#allocation8], 4
      %s46 = int_to_ptr.vmem [resolvable:$true] %s45
      %48 = dma.hbm_to_vmem [thread:$0]  %s44, 16, %s46, [#allocation7]
    $region13: #{tpu_custom_call.1} parent=1 // pred_fallthru
      _
    // Predicated region
    $region14: #{tpu_custom_call.1} parent=1 // pred_check
      _
    $region15: #{tpu_custom_call.1} parent=1 // pred_check_branch
      %50 = sbr.rel (0) target = $region17
    $region16: #{tpu_custom_call.1} parent=1 // pred_region
      %52 = vsyncadd [#allocation10], 0
      %s53 = sshll.u32 %s3, 4
      %s54 = int_to_ptr.hbm [resolvable:$true] %s53
      %s55 = sshll.u32 [#allocation9], 4
      %s56 = int_to_ptr.vmem [resolvable:$true] %s55
      %61 = dma.hbm_to_vmem [thread:$0]  %s54, 3072, %s56, [#allocation10], 64, 64, 4
    $region17: #{tpu_custom_call.1} parent=1 // pred_fallthru
      _
    // Predicated region
    $region18: #{tpu_custom_call.1} parent=1 // pred_check
      _
    $region19: #{tpu_custom_call.1} parent=1 // pred_check_branch
      %63 = sbr.rel (0) target = $region21
    $region20: #{tpu_custom_call.1} parent=1 // pred_region
      _
    $region21: #{tpu_custom_call.1} parent=1 // pred_fallthru
      _
    // Predicated region
    $region22: #{tpu_custom_call.1} parent=1 // pred_check
      _
    $region23: #{tpu_custom_call.1} parent=1 // pred_check_branch
      %65 = sbr.rel (0) target = $region25
    $region24: #{tpu_custom_call.1} parent=1 // pred_region
      %67 = dma.done [#allocation4], 64
    $region25: #{tpu_custom_call.1} parent=1 // pred_fallthru
      _
    // Predicated region
    $region26: #{tpu_custom_call.1} parent=1 // pred_check
      _
    $region27: #{tpu_custom_call.1} parent=1 // pred_check_branch
      %69 = sbr.rel (0) target = $region29
    $region28: #{tpu_custom_call.1} parent=1 // pred_region
      %71 = dma.done [#allocation7], 1024
    $region29: #{tpu_custom_call.1} parent=1 // pred_fallthru
      _
    // Predicated region
    $region30: #{tpu_custom_call.1} parent=1 // pred_check
      _
    $region31: #{tpu_custom_call.1} parent=1 // pred_check_branch
      %73 = sbr.rel (0) target = $region33
    $region32: #{tpu_custom_call.1} parent=1 // pred_region
      %75 = dma.done [#allocation7], 16
    $region33: #{tpu_custom_call.1} parent=1 // pred_fallthru
      _
    // Predicated region
    $region34: #{tpu_custom_call.1} parent=1 // pred_check
      _
    $region35: #{tpu_custom_call.1} parent=1 // pred_check_branch
      %77 = sbr.rel (0) target = $region37
    $region36: #{tpu_custom_call.1} parent=1 // pred_region
      %79 = dma.done [#allocation10], 3072
    $region37: #{tpu_custom_call.1} parent=1 // pred_fallthru
      _
    %v80 = vld [vmem:[#allocation3] sm:$0xf]
    %v81 = vld [vmem:[#allocation6] sm:$0xf]
    %v82 = vld [vmem:[#allocation6 + $0x4] sm:$0xf]
    %v83 = vld [vmem:[#allocation6 + $0x8] sm:$0xf]
    %v84 = vld [vmem:[#allocation6 + $0xc] sm:$0xf]
    %v85 = vld [vmem:[#allocation6 + $0x10] sm:$0xf]
    %v86 = vld [vmem:[#allocation6 + $0x14] sm:$0xf]
    %v87 = vld [vmem:[#allocation6 + $0x18] sm:$0xf]
    %v88 = vld [vmem:[#allocation6 + $0x1c] sm:$0xf]
    %v89 = vld [vmem:[#allocation6 + $0x20] sm:$0xf]
    %v90 = vld [vmem:[#allocation6 + $0x24] sm:$0xf]
    %v91 = vld [vmem:[#allocation6 + $0x28] sm:$0xf]
    %v92 = vld [vmem:[#allocation6 + $0x2c] sm:$0xf]
    %v93 = vld [vmem:[#allocation6 + $0x30] sm:$0xf]
    %v94 = vld [vmem:[#allocation6 + $0x34] sm:$0xf]
    %v95 = vld [vmem:[#allocation6 + $0x38] sm:$0xf]
    %v96 = vld [vmem:[#allocation6 + $0x3c] sm:$0xf]
    %v97 = vld [vmem:[#allocation8] sm:$0x1]
    %v99 = vperm.slane %v97, 0
    %v117 = vunpack.c.l.b16 %v81
    %v118 = vunpack.c.l.b16 %v82
    %v119 = vunpack.c.l.b16 %v83
    %v120 = vunpack.c.l.b16 %v84
    %v121 = vunpack.c.l.b16 %v85
    %v122 = vunpack.c.l.b16 %v86
    %v123 = vunpack.c.l.b16 %v87
    %v124 = vunpack.c.l.b16 %v88
    %v125 = vunpack.c.l.b16 %v89
    %v126 = vunpack.c.l.b16 %v90
    %v127 = vunpack.c.l.b16 %v91
    %v128 = vunpack.c.l.b16 %v92
    %v129 = vunpack.c.l.b16 %v93
    %v130 = vunpack.c.l.b16 %v94
    %v131 = vunpack.c.l.b16 %v95
    %v132 = vunpack.c.l.b16 %v96
    %v133 = vpack.c.b16 %v118, %v117
    %v134 = vpack.c.b16 %v120, %v119
    %v135 = vpack.c.b16 %v122, %v121
    %v136 = vpack.c.b16 %v124, %v123
    %v137 = vpack.c.b16 %v126, %v125
    %v138 = vpack.c.b16 %v128, %v127
    %v139 = vpack.c.b16 %v130, %v129
    %v140 = vpack.c.b16 %v132, %v131
    %149 = vmatpush.bf16.msra.mxu0 %v140
    %150 = vmatpush.bf16.msra.mxu0 %v139
    %151 = vmatpush.bf16.msra.mxu0 %v138
    %152 = vmatpush.bf16.msra.mxu0 %v137
    %153 = vmatpush.bf16.msra.mxu0 %v136
    %154 = vmatpush.bf16.msra.mxu0 %v135
    %155 = vmatpush.bf16.msra.mxu0 %v134
    %156 = vmatpush.bf16.msra.mxu0 %v133
    %157 = vmatmul.bf16.gmra.mxu0 %v80
    %v158 = vpop.f32.mrf.mxu0
    %v159 = vadd.f32 %v99, %v158
    %v160 = vpop.f32.mrf.mxu0
    %161 = vdwg.mxu0
    %v162 = vmax.f32 %v159, 0.0
    %v163 = vpack.c.bf16 %v162, %v162
    %164 = vst [vmem:[#allocation2] sm:$0xf] %v163
    %v165 = vld [vmem:[#allocation2] sm:$0xf]
    %v166 = vld [vmem:[#allocation9] sm:$0xf]
    %v167 = vld [vmem:[#allocation9 + $0x4] sm:$0xf]
    %v168 = vld [vmem:[#allocation9 + $0x8] sm:$0xf]
    %v169 = vld [vmem:[#allocation9 + $0xc] sm:$0xf]
    %v170 = vld [vmem:[#allocation9 + $0x10] sm:$0xf]
    %v171 = vld [vmem:[#allocation9 + $0x14] sm:$0xf]
    %v172 = vld [vmem:[#allocation9 + $0x18] sm:$0xf]
    %v173 = vld [vmem:[#allocation9 + $0x1c] sm:$0xf]
    %v174 = vld [vmem:[#allocation9 + $0x20] sm:$0xf]
    %v175 = vld [vmem:[#allocation9 + $0x24] sm:$0xf]
    %v176 = vld [vmem:[#allocation9 + $0x28] sm:$0xf]
    %v177 = vld [vmem:[#allocation9 + $0x2c] sm:$0xf]
    %v178 = vld [vmem:[#allocation9 + $0x30] sm:$0xf]
    %v179 = vld [vmem:[#allocation9 + $0x34] sm:$0xf]
    %v180 = vld [vmem:[#allocation9 + $0x38] sm:$0xf]
    %v181 = vld [vmem:[#allocation9 + $0x3c] sm:$0xf]
    %v182 = vld [vmem:[%s4] sm:$0x1]
    %v184 = vperm.slane %v182, 0
    %v202 = vunpack.c.l.b16 %v166
    %v203 = vunpack.c.l.b16 %v167
    %v204 = vunpack.c.l.b16 %v168
    %v205 = vunpack.c.l.b16 %v169
    %v206 = vunpack.c.l.b16 %v170
    %v207 = vunpack.c.l.b16 %v171
    %v208 = vunpack.c.l.b16 %v172
    %v209 = vunpack.c.l.b16 %v173
    %v210 = vunpack.c.l.b16 %v174
    %v211 = vunpack.c.l.b16 %v175
    %v212 = vunpack.c.l.b16 %v176
    %v213 = vunpack.c.l.b16 %v177
    %v214 = vunpack.c.l.b16 %v178
    %v215 = vunpack.c.l.b16 %v179
    %v216 = vunpack.c.l.b16 %v180
    %v217 = vunpack.c.l.b16 %v181
    %v218 = vpack.c.b16 %v203, %v202
    %v219 = vpack.c.b16 %v205, %v204
    %v220 = vpack.c.b16 %v207, %v206
    %v221 = vpack.c.b16 %v209, %v208
    %v222 = vpack.c.b16 %v211, %v210
    %v223 = vpack.c.b16 %v213, %v212
    %v224 = vpack.c.b16 %v215, %v214
    %v225 = vpack.c.b16 %v217, %v216
    %234 = vmatpush.bf16.msra.mxu0 %v225
    %235 = vmatpush.bf16.msra.mxu0 %v224
    %236 = vmatpush.bf16.msra.mxu0 %v223
    %237 = vmatpush.bf16.msra.mxu0 %v222
    %238 = vmatpush.bf16.msra.mxu0 %v221
    %239 = vmatpush.bf16.msra.mxu0 %v220
    %240 = vmatpush.bf16.msra.mxu0 %v219
    %241 = vmatpush.bf16.msra.mxu0 %v218
    %242 = vmatmul.bf16.gmra.mxu0 %v165
    %v243 = vpop.f32.mrf.mxu0
    %v244 = vadd.f32 %v184, %v243
    %v245 = vpop.f32.mrf.mxu0
    %246 = vdwg.mxu0
    %v247 = vmax.f32 %v244, 0.0
    %v248 = vpack.c.bf16 %v247, %v247
    %249 = vst [vmem:[#allocation2] sm:$0xf] %v248
    %v250 = vld [vmem:[#allocation2] sm:$0xf]
    %s251 = scalar_lea.vmem [#allocation9], 64
    %v252 = vld [vmem:[%s251] sm:$0xf]
    %v253 = vld [vmem:[%s251 + $0x4] sm:$0xf]
    %v254 = vld [vmem:[%s251 + $0x8] sm:$0xf]
    %v255 = vld [vmem:[%s251 + $0xc] sm:$0xf]
    %v256 = vld [vmem:[%s251 + $0x10] sm:$0xf]
    %v257 = vld [vmem:[%s251 + $0x14] sm:$0xf]
    %v258 = vld [vmem:[%s251 + $0x18] sm:$0xf]
    %v259 = vld [vmem:[%s251 + $0x1c] sm:$0xf]
    %v260 = vld [vmem:[%s251 + $0x20] sm:$0xf]
    %v261 = vld [vmem:[%s251 + $0x24] sm:$0xf]
    %v262 = vld [vmem:[%s251 + $0x28] sm:$0xf]
    %v263 = vld [vmem:[%s251 + $0x2c] sm:$0xf]
    %v264 = vld [vmem:[%s251 + $0x30] sm:$0xf]
    %v265 = vld [vmem:[%s251 + $0x34] sm:$0xf]
    %v266 = vld [vmem:[%s251 + $0x38] sm:$0xf]
    %v267 = vld [vmem:[%s251 + $0x3c] sm:$0xf]
    %s268 = scalar_lea.vmem %s4, 1
    %v269 = vld [vmem:[%s268] sm:$0x1]
    %v271 = vperm.slane %v269, 0
    %v289 = vunpack.c.l.b16 %v252
    %v290 = vunpack.c.l.b16 %v253
    %v291 = vunpack.c.l.b16 %v254
    %v292 = vunpack.c.l.b16 %v255
    %v293 = vunpack.c.l.b16 %v256
    %v294 = vunpack.c.l.b16 %v257
    %v295 = vunpack.c.l.b16 %v258
    %v296 = vunpack.c.l.b16 %v259
    %v297 = vunpack.c.l.b16 %v260
    %v298 = vunpack.c.l.b16 %v261
    %v299 = vunpack.c.l.b16 %v262
    %v300 = vunpack.c.l.b16 %v263
    %v301 = vunpack.c.l.b16 %v264
    %v302 = vunpack.c.l.b16 %v265
    %v303 = vunpack.c.l.b16 %v266
    %v304 = vunpack.c.l.b16 %v267
    %v305 = vpack.c.b16 %v290, %v289
    %v306 = vpack.c.b16 %v292, %v291
    %v307 = vpack.c.b16 %v294, %v293
    %v308 = vpack.c.b16 %v296, %v295
    %v309 = vpack.c.b16 %v298, %v297
    %v310 = vpack.c.b16 %v300, %v299
    %v311 = vpack.c.b16 %v302, %v301
    %v312 = vpack.c.b16 %v304, %v303
    %321 = vmatpush.bf16.msra.mxu0 %v312
    %322 = vmatpush.bf16.msra.mxu0 %v311
    %323 = vmatpush.bf16.msra.mxu0 %v310
    %324 = vmatpush.bf16.msra.mxu0 %v309
    %325 = vmatpush.bf16.msra.mxu0 %v308
    %326 = vmatpush.bf16.msra.mxu0 %v307
    %327 = vmatpush.bf16.msra.mxu0 %v306
    %328 = vmatpush.bf16.msra.mxu0 %v305
    %329 = vmatmul.bf16.gmra.mxu0 %v250
    %v330 = vpop.f32.mrf.mxu0
    %v331 = vadd.f32 %v271, %v330
    %v332 = vpop.f32.mrf.mxu0
    %333 = vdwg.mxu0
    %v334 = vmax.f32 %v331, 0.0
    %v335 = vpack.c.bf16 %v334, %v334
    %336 = vst [vmem:[#allocation2] sm:$0xf] %v335
    %v337 = vld [vmem:[#allocation2] sm:$0xf]
    %s338 = scalar_lea.vmem [#allocation9], 128
    %v339 = vld [vmem:[%s338] sm:$0xf]
    %v340 = vld [vmem:[%s338 + $0x4] sm:$0xf]
    %v341 = vld [vmem:[%s338 + $0x8] sm:$0xf]
    %v342 = vld [vmem:[%s338 + $0xc] sm:$0xf]
    %v343 = vld [vmem:[%s338 + $0x10] sm:$0xf]
    %v344 = vld [vmem:[%s338 + $0x14] sm:$0xf]
    %v345 = vld [vmem:[%s338 + $0x18] sm:$0xf]
    %v346 = vld [vmem:[%s338 + $0x1c] sm:$0xf]
    %v347 = vld [vmem:[%s338 + $0x20] sm:$0xf]
    %v348 = vld [vmem:[%s338 + $0x24] sm:$0xf]
    %v349 = vld [vmem:[%s338 + $0x28] sm:$0xf]
    %v350 = vld [vmem:[%s338 + $0x2c] sm:$0xf]
    %v351 = vld [vmem:[%s338 + $0x30] sm:$0xf]
    %v352 = vld [vmem:[%s338 + $0x34] sm:$0xf]
    %v353 = vld [vmem:[%s338 + $0x38] sm:$0xf]
    %v354 = vld [vmem:[%s338 + $0x3c] sm:$0xf]
    %s355 = scalar_lea.vmem %s4, 2
    %v356 = vld [vmem:[%s355] sm:$0x1]
    %v358 = vperm.slane %v356, 0
    %v376 = vunpack.c.l.b16 %v339
    %v377 = vunpack.c.l.b16 %v340
    %v378 = vunpack.c.l.b16 %v341
    %v379 = vunpack.c.l.b16 %v342
    %v380 = vunpack.c.l.b16 %v343
    %v381 = vunpack.c.l.b16 %v344
    %v382 = vunpack.c.l.b16 %v345
    %v383 = vunpack.c.l.b16 %v346
    %v384 = vunpack.c.l.b16 %v347
    %v385 = vunpack.c.l.b16 %v348
    %v386 = vunpack.c.l.b16 %v349
    %v387 = vunpack.c.l.b16 %v350
    %v388 = vunpack.c.l.b16 %v351
    %v389 = vunpack.c.l.b16 %v352
    %v390 = vunpack.c.l.b16 %v353
    %v391 = vunpack.c.l.b16 %v354
    %v392 = vpack.c.b16 %v377, %v376
    %v393 = vpack.c.b16 %v379, %v378
    %v394 = vpack.c.b16 %v381, %v380
    %v395 = vpack.c.b16 %v383, %v382
    %v396 = vpack.c.b16 %v385, %v384
    %v397 = vpack.c.b16 %v387, %v386
    %v398 = vpack.c.b16 %v389, %v388
    %v399 = vpack.c.b16 %v391, %v390
    %408 = vmatpush.bf16.msra.mxu0 %v399
    %409 = vmatpush.bf16.msra.mxu0 %v398
    %410 = vmatpush.bf16.msra.mxu0 %v397
    %411 = vmatpush.bf16.msra.mxu0 %v396
    %412 = vmatpush.bf16.msra.mxu0 %v395
    %413 = vmatpush.bf16.msra.mxu0 %v394
    %414 = vmatpush.bf16.msra.mxu0 %v393
    %415 = vmatpush.bf16.msra.mxu0 %v392
    %416 = vmatmul.bf16.gmra.mxu0 %v337
    %v417 = vpop.f32.mrf.mxu0
    %v418 = vadd.f32 %v358, %v417
    %v419 = vpop.f32.mrf.mxu0
    %420 = vdwg.mxu0
    %421 = vst [vmem:[#allocation11] sm:$0xff] %v418
    // Predicated region
    $region38: #{tpu_custom_call.1} parent=1 // pred_check
      _
    $region39: #{tpu_custom_call.1} parent=1 // pred_check_branch
      %423 = sbr.rel (0) target = $region41
    $region40: #{tpu_custom_call.1} parent=1 // pred_region
      %425 = vsyncadd [#allocation5], 0
      %s427 = sshll.u32 [#allocation11], 4
      %s428 = int_to_ptr.vmem [resolvable:$true] %s427
      %s429 = sshll.u32 %s5, 4
      %s430 = int_to_ptr.hbm [resolvable:$true] %s429
      %432 = dma.vmem_to_hbm [thread:$0]  %s428, 128, %s430, [#allocation5]
    $region41: #{tpu_custom_call.1} parent=1 // pred_fallthru
      _
    // Predicated region
    $region42: #{tpu_custom_call.1} parent=1 // pred_check
      _
    $region43: #{tpu_custom_call.1} parent=1 // pred_check_branch
      %434 = sbr.rel (0) target = $region45
    $region44: #{tpu_custom_call.1} parent=1 // pred_region
      %436 = dma.done [#allocation5], 128
    $region45: #{tpu_custom_call.1} parent=1 // pred_fallthru
      _
    %437 = vsyncpa [#allocation4], 1
    %438 = vsyncpa [#allocation7], 1
    %439 = vsyncpa [#allocation10], 1
    %440 = vsyncpa [#allocation5], 1

</llo_original>
